<compile_context>
chip_gen: v7x
topology: tpu7x:2x2x1
jax: 0.10.0
libtpu: 0.0.40
codegen_flags: <defaults>
</compile_context>

<pallas_src>
import functools

import jax
import jax.numpy as jnp
import numpy as np
from jax.experimental import pallas as pl
from jax.experimental.pallas import tpu as pltpu

LN_EPS = 1e-5  # torch.nn.LayerNorm default


def _round_up(x, m):
    return ((x + m - 1) // m) * m


def _layernorm_1pass(h, gamma, beta, n_true):
    """LayerNorm over the last axis using sum / sum-of-squares in one pass.

    `h` may be lane-padded with exact zeros beyond `n_true` features; the
    statistics are computed over the true feature count, and gamma/beta are
    zero-padded so padded lanes come out exactly zero.
    """
    s1 = jnp.sum(h, axis=-1, keepdims=True)
    s2 = jnp.sum(h * h, axis=-1, keepdims=True)
    inv_n = 1.0 / n_true
    mean = s1 * inv_n
    var = s2 * inv_n - mean * mean
    return (h - mean) * jax.lax.rsqrt(var + LN_EPS) * gamma + beta


def actor_kernel(
    x_ref,
    w1_ref, b1_ref, g1_ref, be1_ref,
    w2_ref, b2_ref, g2_ref, be2_ref,
    w3_ref, b3_ref,
    out_ref,
    *, n1, n2,
):
    x = x_ref[...]  # already f32, no redundant astype

    # fc1 + LayerNorm + ReLU
    h = jnp.dot(x, w1_ref[...], preferred_element_type=jnp.float32) + b1_ref[...]
    h = _layernorm_1pass(h, g1_ref[...], be1_ref[...], n1)
    h = jnp.maximum(h, 0.0)

    # fc2 + LayerNorm + ReLU
    h = jnp.dot(h, w2_ref[...], preferred_element_type=jnp.float32) + b2_ref[...]
    h = _layernorm_1pass(h, g2_ref[...], be2_ref[...], n2)
    h = jnp.maximum(h, 0.0)

    # mu + tanh   (padded action lanes are tanh(0) = 0; sliced away outside)
    h = jnp.dot(h, w3_ref[...], preferred_element_type=jnp.float32) + b3_ref[...]
    out_ref[...] = jnp.tanh(h)


def actor_forward(x, padded_params, num_actions, *, n1=400, n2=300, tb=256):
    """Run the fused actor forward. `padded_params` come from pad_params()."""
    (w1, b1, g1, be1, w2, b2, g2, be2, w3, b3) = padded_params
    B, D = x.shape
    H1p, H2p, Ap = w1.shape[1], w2.shape[1], w3.shape[1]

    # Batch tile: big enough to amortize per-step overhead, never bigger than
    # the (8-row aligned) batch.  All sizes fit comfortably in every
    # generation's default scoped VMEM limit (incl. v7x's 64 MiB), so no
    # vmem_limit_bytes override is used.
    tb = min(tb, _round_up(B, 8))
    grid = (pl.cdiv(B, tb),)

    def resident(shape):
        # Parameter block never changes across the grid -> stays in VMEM.
        return pl.BlockSpec(shape, lambda i: (0, 0))

    in_specs = [
        pl.BlockSpec((tb, D), lambda i: (i, 0)),          # x tile
        resident((D, H1p)), resident((1, H1p)), resident((1, H1p)), resident((1, H1p)),
        resident((H1p, H2p)), resident((1, H2p)), resident((1, H2p)), resident((1, H2p)),
        resident((H2p, Ap)), resident((1, Ap)),
    ]
    out_specs = pl.BlockSpec((tb, Ap), lambda i: (i, 0))  # lane-dense output

    flops = 2 * B * (D * n1 + n1 * n2 + n2 * num_actions)
    transcendentals = B * (num_actions + 2)               # tanh + 2 rsqrt / row
    bytes_accessed = 4 * (
        B * D + B * num_actions
        + D * H1p + H1p * H2p + H2p * Ap
        + 3 * (H1p + H2p) + Ap
    )

    kern = functools.partial(actor_kernel, n1=float(n1), n2=float(n2))
    out = pl.pallas_call(
        kern,
        out_shape=jax.ShapeDtypeStruct((B, Ap), jnp.float32),
        grid=grid,
        in_specs=in_specs,
        out_specs=out_specs,
        compiler_params=pltpu.CompilerParams(
            dimension_semantics=("parallel",),             # shard batch on v7x's 2 TCs
        ),
        cost_estimate=pl.CostEstimate(
            flops=flops,
            transcendentals=transcendentals,
            bytes_accessed=bytes_accessed,
        ),
    )(x, w1, b1, g1, be1, w2, b2, g2, be2, w3, b3)

    return out[:, :num_actions]


def make_params(key, input_dims, num_actions, num_l1=400, num_l2=300):
    """Deterministic init mirroring the module's uniform init ranges (true dims)."""
    ks = jax.random.split(key, 6)
    f1 = 1.0 / np.sqrt(num_l1)      # module uses weight.size()[0] == out_features
    f2 = 1.0 / np.sqrt(num_l2)
    f3 = 0.003
    # Linear weights stored transposed relative to torch: (in, out).
    w1 = jax.random.uniform(ks[0], (input_dims, num_l1), jnp.float32, -f1, f1)
    b1 = jax.random.uniform(ks[1], (1, num_l1), jnp.float32, -f2, f2)  # fc1.bias re-init'd with f2 in the module
    w2 = jax.random.uniform(ks[2], (num_l1, num_l2), jnp.float32, -f2, f2)
    b2 = jnp.zeros((1, num_l2), jnp.float32)  # NOTE: torch default bias init is uniform; deterministic zero kept here
    w3 = jax.random.uniform(ks[3], (num_l2, num_actions), jnp.float32, -f3, f3)
    b3 = jax.random.uniform(ks[4], (1, num_actions), jnp.float32, -f3, f3)
    # LayerNorm affine params (torch default: gamma=1, beta=0).
    g1 = jnp.ones((1, num_l1), jnp.float32)
    be1 = jnp.zeros((1, num_l1), jnp.float32)
    g2 = jnp.ones((1, num_l2), jnp.float32)
    be2 = jnp.zeros((1, num_l2), jnp.float32)
    return (w1, b1, g1, be1, w2, b2, g2, be2, w3, b3)


def pad_params(params):
    """Zero-pad parameters to 128-lane-aligned feature dims (done once, host/XLA side)."""
    (w1, b1, g1, be1, w2, b2, g2, be2, w3, b3) = params
    h1p = _round_up(w1.shape[1], 128)   # 400 -> 512
    h2p = _round_up(w2.shape[1], 128)   # 300 -> 384
    ap = _round_up(max(w3.shape[1], 128), 128)  # num_actions -> 128

    def pad_cols(a, cols):
        return jnp.pad(a, ((0, 0), (0, cols - a.shape[1])))

    def pad_rows(a, rows):
        return jnp.pad(a, ((0, rows - a.shape[0]), (0, 0)))

    w1p = pad_cols(w1, h1p)
    b1p, g1p, be1p = pad_cols(b1, h1p), pad_cols(g1, h1p), pad_cols(be1, h1p)
    w2p = pad_cols(pad_rows(w2, h1p), h2p)
    b2p, g2p, be2p = pad_cols(b2, h2p), pad_cols(g2, h2p), pad_cols(be2, h2p)
    w3p = pad_cols(pad_rows(w3, h2p), ap)
    b3p = pad_cols(b3, ap)
    return (w1p, b1p, g1p, be1p, w2p, b2p, g2p, be2p, w3p, b3p)


def reference_forward(x, params):
    """Pure-JAX reference on the true (unpadded) parameters, torch-style LN."""
    (w1, b1, g1, be1, w2, b2, g2, be2, w3, b3) = params

    def ln(h, g, be):
        mean = jnp.mean(h, axis=-1, keepdims=True)
        var = jnp.mean((h - mean) * (h - mean), axis=-1, keepdims=True)
        return (h - mean) * jax.lax.rsqrt(var + LN_EPS) * g + be

    h = x @ w1 + b1
    h = jnp.maximum(ln(h, g1, be1), 0.0)
    h = h @ w2 + b2
    h = jnp.maximum(ln(h, g2, be2), 0.0)
    return jnp.tanh(h @ w3 + b3)


if __name__ == "__main__":
    key = jax.random.PRNGKey(0)
    kx, kp = jax.random.split(key)

    batch = 8
    input_dims = 32
    num_actions = 8

    x = jax.random.normal(kx, (batch, input_dims), jnp.float32)
    params = make_params(kp, input_dims, num_actions)
    padded = pad_params(params)

    # Single-tile case (small batch).
    out = actor_forward(x, padded, num_actions, tb=256)
    out = jax.block_until_ready(out)
    ref = reference_forward(x, params)
    np.testing.assert_allclose(np.asarray(out), np.asarray(ref), rtol=1e-4, atol=1e-5)

    # Multi-tile grid case (exercises the batch grid + resident weights).
    x2 = jax.random.normal(kx, (64, input_dims), jnp.float32)
    out2 = jax.block_until_ready(actor_forward(x2, padded, num_actions, tb=16))
    ref2 = reference_forward(x2, params)
    np.testing.assert_allclose(np.asarray(out2), np.asarray(ref2), rtol=1e-4, atol=1e-5)

    # TODO(synk): optimizer (Adam) and checkpoint save/load are host-side training
    # utilities, not part of the forward pass — not translated to Pallas.
    print("KERNEL_OK")
</pallas_src>

<mosaic_0001>
module attributes {stable_mosaic.version = 11 : i64} {
  func.func @actor_kernel(%arg0: i32, %arg1: memref<8x32xf32, #tpu.memory_space<vmem>>, %arg2: memref<32x512xf32, #tpu.memory_space<vmem>>, %arg3: memref<1x512xf32, #tpu.memory_space<vmem>>, %arg4: memref<1x512xf32, #tpu.memory_space<vmem>>, %arg5: memref<1x512xf32, #tpu.memory_space<vmem>>, %arg6: memref<512x384xf32, #tpu.memory_space<vmem>>, %arg7: memref<1x384xf32, #tpu.memory_space<vmem>>, %arg8: memref<1x384xf32, #tpu.memory_space<vmem>>, %arg9: memref<1x384xf32, #tpu.memory_space<vmem>>, %arg10: memref<384x128xf32, #tpu.memory_space<vmem>>, %arg11: memref<1x128xf32, #tpu.memory_space<vmem>>, %arg12: memref<8x128xf32, #tpu.memory_space<vmem>>) attributes {dimension_semantics = [#tpu.dimension_semantics<parallel>], iteration_bounds = array<i64: 1>, scalar_prefetch = 0 : i64, scratch_operands = 0 : i64, tpu.core_type = #tpu.core_type<tc>, window_params = [{transform_indices = @transform_0, window_bounds = array<i64: 8, 32>}, {pipeline_mode = #tpu.pipeline_mode<synchronous>, transform_indices = @transform_1, window_bounds = array<i64: 32, 512>}, {pipeline_mode = #tpu.pipeline_mode<synchronous>, transform_indices = @transform_2, window_bounds = array<i64: 1, 512>}, {pipeline_mode = #tpu.pipeline_mode<synchronous>, transform_indices = @transform_3, window_bounds = array<i64: 1, 512>}, {pipeline_mode = #tpu.pipeline_mode<synchronous>, transform_indices = @transform_4, window_bounds = array<i64: 1, 512>}, {pipeline_mode = #tpu.pipeline_mode<synchronous>, transform_indices = @transform_5, window_bounds = array<i64: 512, 384>}, {pipeline_mode = #tpu.pipeline_mode<synchronous>, transform_indices = @transform_6, window_bounds = array<i64: 1, 384>}, {pipeline_mode = #tpu.pipeline_mode<synchronous>, transform_indices = @transform_7, window_bounds = array<i64: 1, 384>}, {pipeline_mode = #tpu.pipeline_mode<synchronous>, transform_indices = @transform_8, window_bounds = array<i64: 1, 384>}, {pipeline_mode = #tpu.pipeline_mode<synchronous>, transform_indices = @transform_9, window_bounds = array<i64: 384, 128>}, {pipeline_mode = #tpu.pipeline_mode<synchronous>, transform_indices = @transform_10, window_bounds = array<i64: 1, 128>}, {transform_indices = @transform_11, window_bounds = array<i64: 8, 128>}]} {
    %c0 = arith.constant 0 : index
    %c0_0 = arith.constant 0 : index
    %0 = vector.load %arg1[%c0, %c0_0] : memref<8x32xf32, #tpu.memory_space<vmem>>, vector<8x32xf32>
    %c0_1 = arith.constant 0 : index
    %c0_2 = arith.constant 0 : index
    %1 = vector.load %arg2[%c0_1, %c0_2] : memref<32x512xf32, #tpu.memory_space<vmem>>, vector<32x512xf32>
    %cst = arith.constant dense<0.000000e+00> : vector<8x512xf32>
    %2 = tpu.matmul %0, %1, %cst {dimension_numbers = #tpu.dot_dimension_numbers<[1], [0], [0], [1], [0, 0, 1, 1], [], []>} : vector<8x32xf32>, vector<32x512xf32>, vector<8x512xf32> -> vector<8x512xf32>
    %c0_3 = arith.constant 0 : index
    %c0_4 = arith.constant 0 : index
    %3 = vector.load %arg3[%c0_3, %c0_4] : memref<1x512xf32, #tpu.memory_space<vmem>>, vector<1x512xf32>
    %4 = vector.broadcast %3 : vector<1x512xf32> to vector<8x512xf32>
    %5 = arith.addf %2, %4 : vector<8x512xf32>
    %c0_5 = arith.constant 0 : index
    %c0_6 = arith.constant 0 : index
    %6 = vector.load %arg4[%c0_5, %c0_6] : memref<1x512xf32, #tpu.memory_space<vmem>>, vector<1x512xf32>
    %c0_7 = arith.constant 0 : index
    %c0_8 = arith.constant 0 : index
    %7 = vector.load %arg5[%c0_7, %c0_8] : memref<1x512xf32, #tpu.memory_space<vmem>>, vector<1x512xf32>
    %cst_9 = arith.constant dense<0.000000e+00> : vector<8xf32>
    %8 = vector.multi_reduction <add>, %5, %cst_9 [1] : vector<8x512xf32> to vector<8xf32>
    %9 = vector.shape_cast %8 : vector<8xf32> to vector<8x1xf32>
    %10 = arith.mulf %5, %5 : vector<8x512xf32>
    %cst_10 = arith.constant dense<0.000000e+00> : vector<8xf32>
    %11 = vector.multi_reduction <add>, %10, %cst_10 [1] : vector<8x512xf32> to vector<8xf32>
    %12 = vector.shape_cast %11 : vector<8xf32> to vector<8x1xf32>
    %cst_11 = arith.constant 2.500000e-03 : f32
    %13 = vector.broadcast %cst_11 : f32 to vector<8x1xf32>
    %14 = arith.mulf %9, %13 : vector<8x1xf32>
    %cst_12 = arith.constant 2.500000e-03 : f32
    %15 = vector.broadcast %cst_12 : f32 to vector<8x1xf32>
    %16 = arith.mulf %12, %15 : vector<8x1xf32>
    %17 = arith.mulf %14, %14 : vector<8x1xf32>
    %18 = arith.subf %16, %17 : vector<8x1xf32>
    %19 = vector.broadcast %14 : vector<8x1xf32> to vector<8x512xf32>
    %20 = arith.subf %5, %19 : vector<8x512xf32>
    %cst_13 = arith.constant 9.99999974E-6 : f32
    %21 = vector.broadcast %cst_13 : f32 to vector<8x1xf32>
    %22 = arith.addf %18, %21 : vector<8x1xf32>
    %23 = math.rsqrt %22 : vector<8x1xf32>
    %24 = vector.broadcast %23 : vector<8x1xf32> to vector<8x512xf32>
    %25 = arith.mulf %20, %24 : vector<8x512xf32>
    %26 = vector.broadcast %6 : vector<1x512xf32> to vector<8x512xf32>
    %27 = arith.mulf %25, %26 : vector<8x512xf32>
    %28 = vector.broadcast %7 : vector<1x512xf32> to vector<8x512xf32>
    %29 = arith.addf %27, %28 : vector<8x512xf32>
    %cst_14 = arith.constant 0.000000e+00 : f32
    %30 = vector.broadcast %cst_14 : f32 to vector<8x512xf32>
    %31 = arith.maximumf %29, %30 : vector<8x512xf32>
    %c0_15 = arith.constant 0 : index
    %c0_16 = arith.constant 0 : index
    %32 = vector.load %arg6[%c0_15, %c0_16] : memref<512x384xf32, #tpu.memory_space<vmem>>, vector<512x384xf32>
    %cst_17 = arith.constant dense<0.000000e+00> : vector<8x384xf32>
    %33 = tpu.matmul %31, %32, %cst_17 {dimension_numbers = #tpu.dot_dimension_numbers<[1], [0], [0], [1], [0, 0, 1, 1], [], []>} : vector<8x512xf32>, vector<512x384xf32>, vector<8x384xf32> -> vector<8x384xf32>
    %c0_18 = arith.constant 0 : index
    %c0_19 = arith.constant 0 : index
    %34 = vector.load %arg7[%c0_18, %c0_19] : memref<1x384xf32, #tpu.memory_space<vmem>>, vector<1x384xf32>
    %35 = vector.broadcast %34 : vector<1x384xf32> to vector<8x384xf32>
    %36 = arith.addf %33, %35 : vector<8x384xf32>
    %c0_20 = arith.constant 0 : index
    %c0_21 = arith.constant 0 : index
    %37 = vector.load %arg8[%c0_20, %c0_21] : memref<1x384xf32, #tpu.memory_space<vmem>>, vector<1x384xf32>
    %c0_22 = arith.constant 0 : index
    %c0_23 = arith.constant 0 : index
    %38 = vector.load %arg9[%c0_22, %c0_23] : memref<1x384xf32, #tpu.memory_space<vmem>>, vector<1x384xf32>
    %cst_24 = arith.constant dense<0.000000e+00> : vector<8xf32>
    %39 = vector.multi_reduction <add>, %36, %cst_24 [1] : vector<8x384xf32> to vector<8xf32>
    %40 = vector.shape_cast %39 : vector<8xf32> to vector<8x1xf32>
    %41 = arith.mulf %36, %36 : vector<8x384xf32>
    %cst_25 = arith.constant dense<0.000000e+00> : vector<8xf32>
    %42 = vector.multi_reduction <add>, %41, %cst_25 [1] : vector<8x384xf32> to vector<8xf32>
    %43 = vector.shape_cast %42 : vector<8xf32> to vector<8x1xf32>
    %cst_26 = arith.constant 0.00333333341 : f32
    %44 = vector.broadcast %cst_26 : f32 to vector<8x1xf32>
    %45 = arith.mulf %40, %44 : vector<8x1xf32>
    %cst_27 = arith.constant 0.00333333341 : f32
    %46 = vector.broadcast %cst_27 : f32 to vector<8x1xf32>
    %47 = arith.mulf %43, %46 : vector<8x1xf32>
    %48 = arith.mulf %45, %45 : vector<8x1xf32>
    %49 = arith.subf %47, %48 : vector<8x1xf32>
    %50 = vector.broadcast %45 : vector<8x1xf32> to vector<8x384xf32>
    %51 = arith.subf %36, %50 : vector<8x384xf32>
    %cst_28 = arith.constant 9.99999974E-6 : f32
    %52 = vector.broadcast %cst_28 : f32 to vector<8x1xf32>
    %53 = arith.addf %49, %52 : vector<8x1xf32>
    %54 = math.rsqrt %53 : vector<8x1xf32>
    %55 = vector.broadcast %54 : vector<8x1xf32> to vector<8x384xf32>
    %56 = arith.mulf %51, %55 : vector<8x384xf32>
    %57 = vector.broadcast %37 : vector<1x384xf32> to vector<8x384xf32>
    %58 = arith.mulf %56, %57 : vector<8x384xf32>
    %59 = vector.broadcast %38 : vector<1x384xf32> to vector<8x384xf32>
    %60 = arith.addf %58, %59 : vector<8x384xf32>
    %cst_29 = arith.constant 0.000000e+00 : f32
    %61 = vector.broadcast %cst_29 : f32 to vector<8x384xf32>
    %62 = arith.maximumf %60, %61 : vector<8x384xf32>
    %c0_30 = arith.constant 0 : index
    %c0_31 = arith.constant 0 : index
    %63 = vector.load %arg10[%c0_30, %c0_31] : memref<384x128xf32, #tpu.memory_space<vmem>>, vector<384x128xf32>
    %cst_32 = arith.constant dense<0.000000e+00> : vector<8x128xf32>
    %64 = tpu.matmul %62, %63, %cst_32 {dimension_numbers = #tpu.dot_dimension_numbers<[1], [0], [0], [1], [0, 0, 1, 1], [], []>} : vector<8x384xf32>, vector<384x128xf32>, vector<8x128xf32> -> vector<8x128xf32>
    %c0_33 = arith.constant 0 : index
    %c0_34 = arith.constant 0 : index
    %65 = vector.load %arg11[%c0_33, %c0_34] : memref<1x128xf32, #tpu.memory_space<vmem>>, vector<1x128xf32>
    %66 = vector.broadcast %65 : vector<1x128xf32> to vector<8x128xf32>
    %67 = arith.addf %64, %66 : vector<8x128xf32>
    %68 = math.tanh %67 : vector<8x128xf32>
    %c0_35 = arith.constant 0 : index
    %c0_36 = arith.constant 0 : index
    %69 = vector.load %arg12[%c0_35, %c0_36] : memref<8x128xf32, #tpu.memory_space<vmem>>, vector<8x128xf32>
    tpu.vector_store %arg12[%c0_35, %c0_36], %68 {strides = array<i32>} : memref<8x128xf32, #tpu.memory_space<vmem>>, vector<8x128xf32>,
    return
  }
  func.func @transform_0(%arg0: i32) -> (i32, i32) {
    %c0_i32 = arith.constant 0 : i32
    %c0_i32_0 = arith.constant 0 : i32
    return %arg0, %c0_i32 : i32, i32
  }
  func.func @transform_1(%arg0: i32) -> (i32, i32) {
    %c0_i32 = arith.constant 0 : i32
    %c0_i32_0 = arith.constant 0 : i32
    %c0_i32_1 = arith.constant 0 : i32
    return %c0_i32, %c0_i32_0 : i32, i32
  }
  func.func @transform_2(%arg0: i32) -> (i32, i32) {
    %c0_i32 = arith.constant 0 : i32
    %c0_i32_0 = arith.constant 0 : i32
    %c0_i32_1 = arith.constant 0 : i32
    return %c0_i32, %c0_i32_0 : i32, i32
  }
  func.func @transform_3(%arg0: i32) -> (i32, i32) {
    %c0_i32 = arith.constant 0 : i32
    %c0_i32_0 = arith.constant 0 : i32
    %c0_i32_1 = arith.constant 0 : i32
    return %c0_i32, %c0_i32_0 : i32, i32
  }
  func.func @transform_4(%arg0: i32) -> (i32, i32) {
    %c0_i32 = arith.constant 0 : i32
    %c0_i32_0 = arith.constant 0 : i32
    %c0_i32_1 = arith.constant 0 : i32
    return %c0_i32, %c0_i32_0 : i32, i32
  }
  func.func @transform_5(%arg0: i32) -> (i32, i32) {
    %c0_i32 = arith.constant 0 : i32
    %c0_i32_0 = arith.constant 0 : i32
    %c0_i32_1 = arith.constant 0 : i32
    return %c0_i32, %c0_i32_0 : i32, i32
  }
  func.func @transform_6(%arg0: i32) -> (i32, i32) {
    %c0_i32 = arith.constant 0 : i32
    %c0_i32_0 = arith.constant 0 : i32
    %c0_i32_1 = arith.constant 0 : i32
    return %c0_i32, %c0_i32_0 : i32, i32
  }
  func.func @transform_7(%arg0: i32) -> (i32, i32) {
    %c0_i32 = arith.constant 0 : i32
    %c0_i32_0 = arith.constant 0 : i32
    %c0_i32_1 = arith.constant 0 : i32
    return %c0_i32, %c0_i32_0 : i32, i32
  }
  func.func @transform_8(%arg0: i32) -> (i32, i32) {
    %c0_i32 = arith.constant 0 : i32
    %c0_i32_0 = arith.constant 0 : i32
    %c0_i32_1 = arith.constant 0 : i32
    return %c0_i32, %c0_i32_0 : i32, i32
  }
  func.func @transform_9(%arg0: i32) -> (i32, i32) {
    %c0_i32 = arith.constant 0 : i32
    %c0_i32_0 = arith.constant 0 : i32
    %c0_i32_1 = arith.constant 0 : i32
    return %c0_i32, %c0_i32_0 : i32, i32
  }
  func.func @transform_10(%arg0: i32) -> (i32, i32) {
    %c0_i32 = arith.constant 0 : i32
    %c0_i32_0 = arith.constant 0 : i32
    %c0_i32_1 = arith.constant 0 : i32
    return %c0_i32, %c0_i32_0 : i32, i32
  }
  func.func @transform_11(%arg0: i32) -> (i32, i32) {
    %c0_i32 = arith.constant 0 : i32
    %c0_i32_0 = arith.constant 0 : i32
    return %arg0, %c0_i32 : i32, i32
  }
}

</mosaic_0001>

<llo_original>
// kernel: tpu_custom_call.1
$region0: #{tpu_custom_call.1}
  #allocation0 [shape = 'u32[]', space=smem, size = 0x4, offset = 0x4, fixed_abs, tag = 'smem constant byte address 0x4 - core index']
  #allocation1 [shape = 'u32[144,128]{1,0:T(1,128)}', space=vmem, size = 0x12000, scoped, tag = 'internal scratch']
  %s0 = inlined_call_operand.hbm [shape: f32[8,32], index: 0, kind: input, shape index: {}]
  %s1 = inlined_call_operand.hbm [shape: f32[32,512], index: 1, kind: input, shape index: {}]
  %s2 = inlined_call_operand.vmem [shape: f32[1,512], index: 2, kind: input, shape index: {}]
  %s3 = inlined_call_operand.vmem [shape: f32[1,512], index: 3, kind: input, shape index: {}]
  %s4 = inlined_call_operand.vmem [shape: f32[1,512], index: 4, kind: input, shape index: {}]
  %s5 = inlined_call_operand.hbm [shape: f32[512,384], index: 5, kind: input, shape index: {}]
  %s6 = inlined_call_operand.vmem [shape: f32[1,384], index: 6, kind: input, shape index: {}]
  %s7 = inlined_call_operand.vmem [shape: f32[1,384], index: 7, kind: input, shape index: {}]
  %s8 = inlined_call_operand.vmem [shape: f32[1,384], index: 8, kind: input, shape index: {}]
  %s9 = inlined_call_operand.hbm [shape: f32[384,128], index: 9, kind: input, shape index: {}]
  %s10 = inlined_call_operand.vmem [shape: f32[1,128], index: 10, kind: input, shape index: {}]
  %s11 = inlined_call_operand.hbm [shape: f32[8,128], index: 11, kind: output, shape index: {}]
  %s12 = sld [smem:[#allocation0]]
  $region70: #{tpu_custom_call.1} parent=0
    _
  %s14 = ssub.s32 1, %s12
  %s15 = scalar_select 0, %s14, %s12
  $region1: #{tpu_custom_call.1} parent=0
    #allocation2 [shape = 'u8[4096]{0}', space=vmem, size = 0x1000, scoped, tag = 'input window, operand 0, single buffered']
    #allocation3 [shape = 's32[1]{0}', space=sflag, size = 0x4, scoped, tag = 'scoped memory for tpu_custom_call.1']
    #allocation4 [shape = 's32[1]{0}', space=sflag, size = 0x4, scoped, tag = 'scoped memory for tpu_custom_call.1']
    #allocation5 [shape = 'u8[65536]{0}', space=vmem, size = 0x10000, scoped, tag = 'input window, operand 1, single buffered']
    #allocation6 [shape = 's32[1]{0}', space=sflag, size = 0x4, scoped, tag = 'scoped memory for tpu_custom_call.1']
    #allocation7 [shape = 'u8[786432]{0}', space=vmem, size = 0xc0000, scoped, tag = 'input window, operand 5, single buffered']
    #allocation8 [shape = 'u8[196608]{0}', space=vmem, size = 0x30000, scoped, tag = 'input window, operand 9, single buffered']
    #allocation9 [shape = 's32[1]{0}', space=sflag, size = 0x4, scoped, tag = 'scoped memory for tpu_custom_call.1']
    #allocation10 [shape = 'u8[4096]{0}', space=vmem, size = 0x1000, scoped, tag = 'output window, operand 0, single buffered']
    %16 = vsyncpa [#allocation3], 0
    %17 = vsyncpa [#allocation6], 0
    %18 = vsyncpa [#allocation9], 0
    %19 = vsyncpa [#allocation4], 0
    // Predicated region
    $region2: #{tpu_custom_call.1} parent=1 // pred_check
      _
    $region3: #{tpu_custom_call.1} parent=1 // pred_check_branch
      %21 = sbr.rel (0) target = $region5
    $region4: #{tpu_custom_call.1} parent=1 // pred_region
      %s23 = ssub.s32 128, 128
      %24 = vsyncadd [#allocation3], %s23
      %s26 = sshll.u32 [#allocation2], 4
      %s27 = int_to_ptr.vmem [resolvable:$true] %s26
      %29 = dma.hbm_to_vmem [thread:$0]  %s0, 128, %s27, [#allocation3]
    $region5: #{tpu_custom_call.1} parent=1 // pred_fallthru
      _
    // Predicated region
    $region6: #{tpu_custom_call.1} parent=1 // pred_check
      _
    $region7: #{tpu_custom_call.1} parent=1 // pred_check_branch
      %31 = sbr.rel (0) target = $region9
    $region8: #{tpu_custom_call.1} parent=1 // pred_region
      %s33 = ssub.s32 2048, 2048
      %34 = vsyncadd [#allocation6], %s33
      %s35 = sshll.u32 [#allocation5], 4
      %s36 = int_to_ptr.vmem [resolvable:$true] %s35
      %41 = dma.hbm_to_vmem [thread:$0]  %s1, 2048, %s36, [#allocation6], 512, 512, 32
    $region9: #{tpu_custom_call.1} parent=1 // pred_fallthru
      _
    // Predicated region
    $region10: #{tpu_custom_call.1} parent=1 // pred_check
      _
    $region11: #{tpu_custom_call.1} parent=1 // pred_check_branch
      %43 = sbr.rel (0) target = $region13
    $region12: #{tpu_custom_call.1} parent=1 // pred_region
      _
    $region13: #{tpu_custom_call.1} parent=1 // pred_fallthru
      _
    // Predicated region
    $region14: #{tpu_custom_call.1} parent=1 // pred_check
      _
    $region15: #{tpu_custom_call.1} parent=1 // pred_check_branch
      %45 = sbr.rel (0) target = $region17
    $region16: #{tpu_custom_call.1} parent=1 // pred_region
      _
    $region17: #{tpu_custom_call.1} parent=1 // pred_fallthru
      _
    // Predicated region
    $region18: #{tpu_custom_call.1} parent=1 // pred_check
      _
    $region19: #{tpu_custom_call.1} parent=1 // pred_check_branch
      %47 = sbr.rel (0) target = $region21
    $region20: #{tpu_custom_call.1} parent=1 // pred_region
      _
    $region21: #{tpu_custom_call.1} parent=1 // pred_fallthru
      _
    // Predicated region
    $region22: #{tpu_custom_call.1} parent=1 // pred_check
      _
    $region23: #{tpu_custom_call.1} parent=1 // pred_check_branch
      %49 = sbr.rel (0) target = $region25
    $region24: #{tpu_custom_call.1} parent=1 // pred_region
      %s51 = ssub.s32 24576, 24576
      %52 = vsyncadd [#allocation6], %s51
      %s53 = sshll.u32 [#allocation7], 4
      %s54 = int_to_ptr.vmem [resolvable:$true] %s53
      %59 = dma.hbm_to_vmem [thread:$0]  %s5, 24576, %s54, [#allocation6], 384, 384, 24
    $region25: #{tpu_custom_call.1} parent=1 // pred_fallthru
      _
    // Predicated region
    $region26: #{tpu_custom_call.1} parent=1 // pred_check
      _
    $region27: #{tpu_custom_call.1} parent=1 // pred_check_branch
      %61 = sbr.rel (0) target = $region29
    $region28: #{tpu_custom_call.1} parent=1 // pred_region
      _
    $region29: #{tpu_custom_call.1} parent=1 // pred_fallthru
      _
    // Predicated region
    $region30: #{tpu_custom_call.1} parent=1 // pred_check
      _
    $region31: #{tpu_custom_call.1} parent=1 // pred_check_branch
      %63 = sbr.rel (0) target = $region33
    $region32: #{tpu_custom_call.1} parent=1 // pred_region
      _
    $region33: #{tpu_custom_call.1} parent=1 // pred_fallthru
      _
    // Predicated region
    $region34: #{tpu_custom_call.1} parent=1 // pred_check
      _
    $region35: #{tpu_custom_call.1} parent=1 // pred_check_branch
      %65 = sbr.rel (0) target = $region37
    $region36: #{tpu_custom_call.1} parent=1 // pred_region
      _
    $region37: #{tpu_custom_call.1} parent=1 // pred_fallthru
      _
    // Predicated region
    $region38: #{tpu_custom_call.1} parent=1 // pred_check
      _
    $region39: #{tpu_custom_call.1} parent=1 // pred_check_branch
      %67 = sbr.rel (0) target = $region41
    $region40: #{tpu_custom_call.1} parent=1 // pred_region
      %s69 = ssub.s32 6144, 6144
      %70 = vsyncadd [#allocation9], %s69
      %s71 = sshll.u32 [#allocation8], 4
      %s72 = int_to_ptr.vmem [resolvable:$true] %s71
      %77 = dma.hbm_to_vmem [thread:$0]  %s9, 6144, %s72, [#allocation9], 128, 128, 8
    $region41: #{tpu_custom_call.1} parent=1 // pred_fallthru
      _
    // Predicated region
    $region42: #{tpu_custom_call.1} parent=1 // pred_check
      _
    $region43: #{tpu_custom_call.1} parent=1 // pred_check_branch
      %79 = sbr.rel (0) target = $region45
    $region44: #{tpu_custom_call.1} parent=1 // pred_region
      _
    $region45: #{tpu_custom_call.1} parent=1 // pred_fallthru
      _
    // Predicated region
    $region46: #{tpu_custom_call.1} parent=1 // pred_check
      _
    $region47: #{tpu_custom_call.1} parent=1 // pred_check_branch
      %81 = sbr.rel (0) target = $region49
    $region48: #{tpu_custom_call.1} parent=1 // pred_region
      %82 = dma.done [#allocation3], 128
    $region49: #{tpu_custom_call.1} parent=1 // pred_fallthru
      _
    // Predicated region
    $region50: #{tpu_custom_call.1} parent=1 // pred_check
      _
    $region51: #{tpu_custom_call.1} parent=1 // pred_check_branch
      %84 = sbr.rel (0) target = $region53
    $region52: #{tpu_custom_call.1} parent=1 // pred_region
      %85 = dma.done [#allocation6], 2048
    $region53: #{tpu_custom_call.1} parent=1 // pred_fallthru
      _
    // Predicated region
    $region54: #{tpu_custom_call.1} parent=1 // pred_check
      _
    $region55: #{tpu_custom_call.1} parent=1 // pred_check_branch
      %87 = sbr.rel (0) target = $region57
    $region56: #{tpu_custom_call.1} parent=1 // pred_region
      %88 = dma.done [#allocation6], 24576
    $region57: #{tpu_custom_call.1} parent=1 // pred_fallthru
      _
    // Predicated region
    $region58: #{tpu_custom_call.1} parent=1 // pred_check
      _
    $region59: #{tpu_custom_call.1} parent=1 // pred_check_branch
      %90 = sbr.rel (0) target = $region61
    $region60: #{tpu_custom_call.1} parent=1 // pred_region
      %91 = dma.done [#allocation9], 6144
    $region61: #{tpu_custom_call.1} parent=1 // pred_fallthru
      _
    %v92 = vld [vmem:[#allocation2] sm:$0xff]
    %v93 = vld [vmem:[#allocation5] sm:$0xff]
    %v94 = vld [vmem:[#allocation5 + $0x8] sm:$0xff]
    %v95 = vld [vmem:[#allocation5 + $0x10] sm:$0xff]
    %v96 = vld [vmem:[#allocation5 + $0x18] sm:$0xff]
    %v97 = vld [vmem:[#allocation5 + $0x20] sm:$0xff]
    %v98 = vld [vmem:[#allocation5 + $0x28] sm:$0xff]
    %v99 = vld [vmem:[#allocation5 + $0x30] sm:$0xff]
    %v100 = vld [vmem:[#allocation5 + $0x38] sm:$0xff]
    %v101 = vld [vmem:[#allocation5 + $0x40] sm:$0xff]
    %v102 = vld [vmem:[#allocation5 + $0x48] sm:$0xff]
    %v103 = vld [vmem:[#allocation5 + $0x50] sm:$0xff]
    %v104 = vld [vmem:[#allocation5 + $0x58] sm:$0xff]
    %v105 = vld [vmem:[#allocation5 + $0x60] sm:$0xff]
    %v106 = vld [vmem:[#allocation5 + $0x68] sm:$0xff]
    %v107 = vld [vmem:[#allocation5 + $0x70] sm:$0xff]
    %v108 = vld [vmem:[#allocation5 + $0x78] sm:$0xff]
    %v109 = vld [vmem:[%s2] sm:$0xf]
    %v111 = vlaneseq
    %v112 = vshrl.u32 %v111, 7
    %v113 = vsub.s32 0, %v112
    %v114 = vrot.slane %v109, %v113
    %v115 = vlaneseq
    %v116 = vshrl.u32 %v115, 7
    %v117 = vsub.s32 1, %v116
    %v118 = vrot.slane %v109, %v117
    %v119 = vlaneseq
    %v120 = vshrl.u32 %v119, 7
    %v121 = vsub.s32 2, %v120
    %v122 = vrot.slane %v109, %v121
    %v123 = vlaneseq
    %v124 = vshrl.u32 %v123, 7
    %v125 = vsub.s32 3, %v124
    %v126 = vrot.slane %v109, %v125
    %vm131 = vcmask 261120
    %v133 = vsel %vm131, %v92, 0
    %135 = vmatprep.subr.mxu0 %v94
    %136 = vmatpush1.msra.mxu0 %v93
    %137 = vmatprep.subr.mxu0 %v98
    %138 = vmatpush1.msra.mxu0 %v97
    %139 = vmatprep.subr.mxu0 %v102
    %140 = vmatpush1.msra.mxu0 %v101
    %141 = vmatprep.subr.mxu0 %v106
    %142 = vmatpush1.msra.mxu0 %v105
    %143 = vmatprep.subr.mxu0 0.0
    %144 = vmatpush1.msra.mxu0 0.0
    %145 = vmatprep.subr.mxu0 0.0
    %146 = vmatpush1.msra.mxu0 0.0
    %147 = vmatprep.subr.mxu0 0.0
    %148 = vmatpush1.msra.mxu0 0.0
    %149 = vmatprep.subr.mxu0 0.0
    %150 = vmatpush1.msra.mxu0 0.0
    %151 = vmatprep.subr.mxu0 0.0
    %152 = vmatpush1.msra.mxu0 0.0
    %153 = vmatprep.subr.mxu0 0.0
    %154 = vmatpush1.msra.mxu0 0.0
    %155 = vmatprep.subr.mxu0 0.0
    %156 = vmatpush1.msra.mxu0 0.0
    %157 = vmatprep.subr.mxu0 0.0
    %158 = vmatpush1.msra.mxu0 0.0
    %159 = vmatprep.subr.mxu0 0.0
    %160 = vmatpush1.msra.mxu0 0.0
    %161 = vmatprep.subr.mxu0 0.0
    %162 = vmatpush1.msra.mxu0 0.0
    %163 = vmatprep.subr.mxu0 0.0
    %164 = vmatpush1.msra.mxu0 0.0
    %165 = vmatprep.subr.mxu0 0.0
    %166 = vmatpush1.msra.mxu0 0.0
    %167 = vmatprep.subr.mxu0 0.0
    %168 = vmatpush1.msra.mxu0 0.0
    %169 = vmatprep.subr.mxu0 0.0
    %170 = vmatpush1.msra.mxu0 0.0
    %171 = vmatprep.subr.mxu0 0.0
    %172 = vmatpush1.msra.mxu0 0.0
    %173 = vmatprep.subr.mxu0 0.0
    %174 = vmatpush1.msra.mxu0 0.0
    %175 = vmatprep.subr.mxu0 0.0
    %176 = vmatpush1.msra.mxu0 0.0
    %177 = vmatprep.subr.mxu0 0.0
    %178 = vmatpush1.msra.mxu0 0.0
    %179 = vmatprep.subr.mxu0 0.0
    %180 = vmatpush1.msra.mxu0 0.0
    %181 = vmatprep.subr.mxu0 0.0
    %182 = vmatpush1.msra.mxu0 0.0
    %183 = vmatprep.subr.mxu0 0.0
    %184 = vmatpush1.msra.mxu0 0.0
    %185 = vmatprep.subr.mxu0 0.0
    %186 = vmatpush1.msra.mxu0 0.0
    %187 = vmatprep.subr.mxu0 0.0
    %188 = vmatpush1.msra.mxu0 0.0
    %189 = vmatprep.subr.mxu0 0.0
    %190 = vmatpush1.msra.mxu0 0.0
    %191 = vmatprep.subr.mxu0 0.0
    %192 = vmatpush1.msra.mxu0 0.0
    %193 = vmatprep.subr.mxu0 0.0
    %194 = vmatpush1.msra.mxu0 0.0
    %195 = vmatprep.subr.mxu0 0.0
    %196 = vmatpush1.msra.mxu0 0.0
    %197 = vmatprep.subr.mxu0 0.0
    %198 = vmatpush1.msra.mxu0 0.0
    %199 = vmatprep.mubr.f32.mxu0 0.0
    %200 = vmatmul.mubr.f32.gmra.mrb[0].mxu0 %v133
    %v201 = vpop.f32.mrb[0].mxu0
    %v202 = vadd.f32 %v114, %v201
    %v203 = vpop.f32.mrb[0].mxu0
    %v204 = vadd.f32 %v118, %v203
    %205 = vdwg.mxu0
    %206 = vmatprep.subr.mxu0 %v96
    %207 = vmatpush1.msra.mxu0 %v95
    %208 = vmatprep.subr.mxu0 %v100
    %209 = vmatpush1.msra.mxu0 %v99
    %210 = vmatprep.subr.mxu0 %v104
    %211 = vmatpush1.msra.mxu0 %v103
    %212 = vmatprep.subr.mxu0 %v108
    %213 = vmatpush1.msra.mxu0 %v107
    %214 = vmatprep.subr.mxu0 0.0
    %215 = vmatpush1.msra.mxu0 0.0
    %216 = vmatprep.subr.mxu0 0.0
    %217 = vmatpush1.msra.mxu0 0.0
    %218 = vmatprep.subr.mxu0 0.0
    %219 = vmatpush1.msra.mxu0 0.0
    %220 = vmatprep.subr.mxu0 0.0
    %221 = vmatpush1.msra.mxu0 0.0
    %222 = vmatprep.subr.mxu0 0.0
    %223 = vmatpush1.msra.mxu0 0.0
    %224 = vmatprep.subr.mxu0 0.0
    %225 = vmatpush1.msra.mxu0 0.0
    %226 = vmatprep.subr.mxu0 0.0
    %227 = vmatpush1.msra.mxu0 0.0
    %228 = vmatprep.subr.mxu0 0.0
    %229 = vmatpush1.msra.mxu0 0.0
    %230 = vmatprep.subr.mxu0 0.0
    %231 = vmatpush1.msra.mxu0 0.0
    %232 = vmatprep.subr.mxu0 0.0
    %233 = vmatpush1.msra.mxu0 0.0
    %234 = vmatprep.subr.mxu0 0.0
    %235 = vmatpush1.msra.mxu0 0.0
    %236 = vmatprep.subr.mxu0 0.0
    %237 = vmatpush1.msra.mxu0 0.0
    %238 = vmatprep.subr.mxu0 0.0
    %239 = vmatpush1.msra.mxu0 0.0
    %240 = vmatprep.subr.mxu0 0.0
    %241 = vmatpush1.msra.mxu0 0.0
    %242 = vmatprep.subr.mxu0 0.0
    %243 = vmatpush1.msra.mxu0 0.0
    %244 = vmatprep.subr.mxu0 0.0
    %245 = vmatpush1.msra.mxu0 0.0
    %246 = vmatprep.subr.mxu0 0.0
    %247 = vmatpush1.msra.mxu0 0.0
    %248 = vmatprep.subr.mxu0 0.0
    %249 = vmatpush1.msra.mxu0 0.0
    %250 = vmatprep.subr.mxu0 0.0
    %251 = vmatpush1.msra.mxu0 0.0
    %252 = vmatprep.subr.mxu0 0.0
    %253 = vmatpush1.msra.mxu0 0.0
    %254 = vmatprep.subr.mxu0 0.0
    %255 = vmatpush1.msra.mxu0 0.0
    %256 = vmatprep.subr.mxu0 0.0
    %257 = vmatpush1.msra.mxu0 0.0
    %258 = vmatprep.subr.mxu0 0.0
    %259 = vmatpush1.msra.mxu0 0.0
    %260 = vmatprep.subr.mxu0 0.0
    %261 = vmatpush1.msra.mxu0 0.0
    %262 = vmatprep.subr.mxu0 0.0
    %263 = vmatpush1.msra.mxu0 0.0
    %264 = vmatprep.subr.mxu0 0.0
    %265 = vmatpush1.msra.mxu0 0.0
    %266 = vmatprep.subr.mxu0 0.0
    %267 = vmatpush1.msra.mxu0 0.0
    %268 = vmatprep.subr.mxu0 0.0
    %269 = vmatpush1.msra.mxu0 0.0
    %270 = vmatprep.mubr.f32.mxu0 0.0
    %271 = vmatmul.mubr.f32.gmra.mrb[0].mxu0 %v133
    %v272 = vpop.f32.mrb[0].mxu0
    %v273 = vadd.f32 %v122, %v272
    %v274 = vpop.f32.mrb[0].mxu0
    %v275 = vadd.f32 %v126, %v274
    %276 = vdwg.mxu0
    %v277 = vld [vmem:[%s3] sm:$0xf]
    %v278 = vld [vmem:[%s4] sm:$0xf]
    %v279 = vadd.f32 %v202, %v204
    %v280 = vadd.f32 %v279, %v273
    %v281 = vadd.f32 %v280, %v275
    %282 = vadd.xlane.f32.xlu0 %v281
    %v283 = vpop.xlane.xlu0 %282
    %v284 = vmul.f32 %v202, %v202
    %v285 = vmul.f32 %v204, %v204
    %v286 = vmul.f32 %v273, %v273
    %v287 = vmul.f32 %v275, %v275
    %v288 = vadd.f32 %v284, %v285
    %v289 = vadd.f32 %v288, %v286
    %v290 = vadd.f32 %v289, %v287
    %291 = vadd.xlane.f32.xlu0 %v290
    %v292 = vpop.xlane.xlu0 %291
    %v293 = vmul.f32 %v283, 0.0025
    %v294 = vmul.f32 %v292, 0.0025
    %v295 = vmul.f32 %v293, %v293
    %v296 = vsub.f32 %v294, %v295
    %v297 = vsub.f32 %v202, %v293
    %v298 = vsub.f32 %v204, %v293
    %v299 = vsub.f32 %v273, %v293
    %v300 = vsub.f32 %v275, %v293
    %v301 = vadd.f32 %v296, 1e-05
    %v302 = vrsqrt.pop %v301
    %v303 = vmul.f32 %v297, %v302
    %v304 = vmul.f32 %v298, %v302
    %v305 = vmul.f32 %v299, %v302
    %v306 = vmul.f32 %v300, %v302
    %v308 = vlaneseq
    %v309 = vshrl.u32 %v308, 7
    %v310 = vsub.s32 0, %v309
    %v311 = vrot.slane %v277, %v310
    %v312 = vlaneseq
    %v313 = vshrl.u32 %v312, 7
    %v314 = vsub.s32 1, %v313
    %v315 = vrot.slane %v277, %v314
    %v316 = vlaneseq
    %v317 = vshrl.u32 %v316, 7
    %v318 = vsub.s32 2, %v317
    %v319 = vrot.slane %v277, %v318
    %v320 = vlaneseq
    %v321 = vshrl.u32 %v320, 7
    %v322 = vsub.s32 3, %v321
    %v323 = vrot.slane %v277, %v322
    %v328 = vmul.f32 %v303, %v311
    %v329 = vmul.f32 %v304, %v315
    %v330 = vmul.f32 %v305, %v319
    %v331 = vmul.f32 %v306, %v323
    %v333 = vlaneseq
    %v334 = vshrl.u32 %v333, 7
    %v335 = vsub.s32 0, %v334
    %v336 = vrot.slane %v278, %v335
    %v337 = vlaneseq
    %v338 = vshrl.u32 %v337, 7
    %v339 = vsub.s32 1, %v338
    %v340 = vrot.slane %v278, %v339
    %v341 = vlaneseq
    %v342 = vshrl.u32 %v341, 7
    %v343 = vsub.s32 2, %v342
    %v344 = vrot.slane %v278, %v343
    %v345 = vlaneseq
    %v346 = vshrl.u32 %v345, 7
    %v347 = vsub.s32 3, %v346
    %v348 = vrot.slane %v278, %v347
    %v353 = vadd.f32 %v328, %v336
    %v354 = vadd.f32 %v329, %v340
    %v355 = vadd.f32 %v330, %v344
    %v356 = vadd.f32 %v331, %v348
    %v357 = vmax.f32 %v353, 0.0
    %v358 = vmax.f32 %v354, 0.0
    %v359 = vmax.f32 %v355, 0.0
    %v360 = vmax.f32 %v356, 0.0
    %v361 = vld [vmem:[#allocation7] sm:$0xff]
    %v362 = vld [vmem:[#allocation7 + $0x8] sm:$0xff]
    %v363 = vld [vmem:[#allocation7 + $0x10] sm:$0xff]
    %v364 = vld [vmem:[#allocation7 + $0x18] sm:$0xff]
    %v365 = vld [vmem:[#allocation7 + $0x20] sm:$0xff]
    %v366 = vld [vmem:[#allocation7 + $0x28] sm:$0xff]
    %v367 = vld [vmem:[#allocation7 + $0x30] sm:$0xff]
    %v368 = vld [vmem:[#allocation7 + $0x38] sm:$0xff]
    %v369 = vld [vmem:[#allocation7 + $0x40] sm:$0xff]
    %v370 = vld [vmem:[#allocation7 + $0x48] sm:$0xff]
    %v371 = vld [vmem:[#allocation7 + $0x50] sm:$0xff]
    %v372 = vld [vmem:[#allocation7 + $0x58] sm:$0xff]
    %v373 = vld [vmem:[#allocation7 + $0x60] sm:$0xff]
    %v374 = vld [vmem:[#allocation7 + $0x68] sm:$0xff]
    %v375 = vld [vmem:[#allocation7 + $0x70] sm:$0xff]
    %v376 = vld [vmem:[#allocation7 + $0x78] sm:$0xff]
    %v377 = vld [vmem:[#allocation7 + $0x80] sm:$0xff]
    %v378 = vld [vmem:[#allocation7 + $0x88] sm:$0xff]
    %v379 = vld [vmem:[#allocation7 + $0x90] sm:$0xff]
    %v380 = vld [vmem:[#allocation7 + $0x98] sm:$0xff]
    %v381 = vld [vmem:[#allocation7 + $0xa0] sm:$0xff]
    %v382 = vld [vmem:[#allocation7 + $0xa8] sm:$0xff]
    %v383 = vld [vmem:[#allocation7 + $0xb0] sm:$0xff]
    %v384 = vld [vmem:[#allocation7 + $0xb8] sm:$0xff]
    %v385 = vld [vmem:[#allocation7 + $0xc0] sm:$0xff]
    %v386 = vld [vmem:[#allocation7 + $0xc8] sm:$0xff]
    %v387 = vld [vmem:[#allocation7 + $0xd0] sm:$0xff]
    %v388 = vld [vmem:[#allocation7 + $0xd8] sm:$0xff]
    %v389 = vld [vmem:[#allocation7 + $0xe0] sm:$0xff]
    %v390 = vld [vmem:[#allocation7 + $0xe8] sm:$0xff]
    %v391 = vld [vmem:[#allocation7 + $0xf0] sm:$0xff]
    %v392 = vld [vmem:[#allocation7 + $0xf8] sm:$0xff]
    %v393 = vld [vmem:[#allocation7 + $0x100] sm:$0xff]
    %v394 = vld [vmem:[#allocation7 + $0x108] sm:$0xff]
    %v395 = vld [vmem:[#allocation7 + $0x110] sm:$0xff]
    %v396 = vld [vmem:[#allocation7 + $0x118] sm:$0xff]
    %v397 = vld [vmem:[#allocation7 + $0x120] sm:$0xff]
    %v398 = vld [vmem:[#allocation7 + $0x128] sm:$0xff]
    %v399 = vld [vmem:[#allocation7 + $0x130] sm:$0xff]
    %v400 = vld [vmem:[#allocation7 + $0x138] sm:$0xff]
    %v401 = vld [vmem:[#allocation7 + $0x140] sm:$0xff]
    %v402 = vld [vmem:[#allocation7 + $0x148] sm:$0xff]
    %v403 = vld [vmem:[#allocation7 + $0x150] sm:$0xff]
    %v404 = vld [vmem:[#allocation7 + $0x158] sm:$0xff]
    %v405 = vld [vmem:[#allocation7 + $0x160] sm:$0xff]
    %v406 = vld [vmem:[#allocation7 + $0x168] sm:$0xff]
    %v407 = vld [vmem:[#allocation7 + $0x170] sm:$0xff]
    %v408 = vld [vmem:[#allocation7 + $0x178] sm:$0xff]
    %v409 = vld [vmem:[#allocation7 + $0x180] sm:$0xff]
    %v410 = vld [vmem:[#allocation7 + $0x188] sm:$0xff]
    %v411 = vld [vmem:[#allocation7 + $0x190] sm:$0xff]
    %v412 = vld [vmem:[#allocation7 + $0x198] sm:$0xff]
    %v413 = vld [vmem:[#allocation7 + $0x1a0] sm:$0xff]
    %v414 = vld [vmem:[#allocation7 + $0x1a8] sm:$0xff]
    %v415 = vld [vmem:[#allocation7 + $0x1b0] sm:$0xff]
    %v416 = vld [vmem:[#allocation7 + $0x1b8] sm:$0xff]
    %v417 = vld [vmem:[#allocation7 + $0x1c0] sm:$0xff]
    %v418 = vld [vmem:[#allocation7 + $0x1c8] sm:$0xff]
    %v419 = vld [vmem:[#allocation7 + $0x1d0] sm:$0xff]
    %v420 = vld [vmem:[#allocation7 + $0x1d8] sm:$0xff]
    %v421 = vld [vmem:[#allocation7 + $0x1e0] sm:$0xff]
    %v422 = vld [vmem:[#allocation7 + $0x1e8] sm:$0xff]
    %v423 = vld [vmem:[#allocation7 + $0x1f0] sm:$0xff]
    %v424 = vld [vmem:[#allocation7 + $0x1f8] sm:$0xff]
    %v425 = vld [vmem:[#allocation7 + $0x200] sm:$0xff]
    %v426 = vld [vmem:[#allocation7 + $0x208] sm:$0xff]
    %v427 = vld [vmem:[#allocation7 + $0x210] sm:$0xff]
    %v428 = vld [vmem:[#allocation7 + $0x218] sm:$0xff]
    %v429 = vld [vmem:[#allocation7 + $0x220] sm:$0xff]
    %v430 = vld [vmem:[#allocation7 + $0x228] sm:$0xff]
    %v431 = vld [vmem:[#allocation7 + $0x230] sm:$0xff]
    %v432 = vld [vmem:[#allocation7 + $0x238] sm:$0xff]
    %v433 = vld [vmem:[#allocation7 + $0x240] sm:$0xff]
    %v434 = vld [vmem:[#allocation7 + $0x248] sm:$0xff]
    %v435 = vld [vmem:[#allocation7 + $0x250] sm:$0xff]
    %v436 = vld [vmem:[#allocation7 + $0x258] sm:$0xff]
    %v437 = vld [vmem:[#allocation7 + $0x260] sm:$0xff]
    %v438 = vld [vmem:[#allocation7 + $0x268] sm:$0xff]
    %v439 = vld [vmem:[#allocation7 + $0x270] sm:$0xff]
    %v440 = vld [vmem:[#allocation7 + $0x278] sm:$0xff]
    %v441 = vld [vmem:[#allocation7 + $0x280] sm:$0xff]
    %v442 = vld [vmem:[#allocation7 + $0x288] sm:$0xff]
    %v443 = vld [vmem:[#allocation7 + $0x290] sm:$0xff]
    %v444 = vld [vmem:[#allocation7 + $0x298] sm:$0xff]
    %v445 = vld [vmem:[#allocation7 + $0x2a0] sm:$0xff]
    %v446 = vld [vmem:[#allocation7 + $0x2a8] sm:$0xff]
    %v447 = vld [vmem:[#allocation7 + $0x2b0] sm:$0xff]
    %v448 = vld [vmem:[#allocation7 + $0x2b8] sm:$0xff]
    %v449 = vld [vmem:[#allocation7 + $0x2c0] sm:$0xff]
    %v450 = vld [vmem:[#allocation7 + $0x2c8] sm:$0xff]
    %v451 = vld [vmem:[#allocation7 + $0x2d0] sm:$0xff]
    %v452 = vld [vmem:[#allocation7 + $0x2d8] sm:$0xff]
    %v453 = vld [vmem:[#allocation7 + $0x2e0] sm:$0xff]
    %v454 = vld [vmem:[#allocation7 + $0x2e8] sm:$0xff]
    %v455 = vld [vmem:[#allocation7 + $0x2f0] sm:$0xff]
    %v456 = vld [vmem:[#allocation7 + $0x2f8] sm:$0xff]
    %v457 = vld [vmem:[#allocation7 + $0x300] sm:$0xff]
    %v458 = vld [vmem:[#allocation7 + $0x308] sm:$0xff]
    %v459 = vld [vmem:[#allocation7 + $0x310] sm:$0xff]
    %v460 = vld [vmem:[#allocation7 + $0x318] sm:$0xff]
    %v461 = vld [vmem:[#allocation7 + $0x320] sm:$0xff]
    %v462 = vld [vmem:[#allocation7 + $0x328] sm:$0xff]
    %v463 = vld [vmem:[#allocation7 + $0x330] sm:$0xff]
    %v464 = vld [vmem:[#allocation7 + $0x338] sm:$0xff]
    %v465 = vld [vmem:[#allocation7 + $0x340] sm:$0xff]
    %v466 = vld [vmem:[#allocation7 + $0x348] sm:$0xff]
    %v467 = vld [vmem:[#allocation7 + $0x350] sm:$0xff]
    %v468 = vld [vmem:[#allocation7 + $0x358] sm:$0xff]
    %v469 = vld [vmem:[#allocation7 + $0x360] sm:$0xff]
    %v470 = vld [vmem:[#allocation7 + $0x368] sm:$0xff]
    %v471 = vld [vmem:[#allocation7 + $0x370] sm:$0xff]
    %v472 = vld [vmem:[#allocation7 + $0x378] sm:$0xff]
    %v473 = vld [vmem:[#allocation7 + $0x380] sm:$0xff]
    %v474 = vld [vmem:[#allocation7 + $0x388] sm:$0xff]
    %v475 = vld [vmem:[#allocation7 + $0x390] sm:$0xff]
    %v476 = vld [vmem:[#allocation7 + $0x398] sm:$0xff]
    %v477 = vld [vmem:[#allocation7 + $0x3a0] sm:$0xff]
    %v478 = vld [vmem:[#allocation7 + $0x3a8] sm:$0xff]
    %v479 = vld [vmem:[#allocation7 + $0x3b0] sm:$0xff]
    %v480 = vld [vmem:[#allocation7 + $0x3b8] sm:$0xff]
    %v481 = vld [vmem:[#allocation7 + $0x3c0] sm:$0xff]
    %v482 = vld [vmem:[#allocation7 + $0x3c8] sm:$0xff]
    %v483 = vld [vmem:[#allocation7 + $0x3d0] sm:$0xff]
    %v484 = vld [vmem:[#allocation7 + $0x3d8] sm:$0xff]
    %v485 = vld [vmem:[#allocation7 + $0x3e0] sm:$0xff]
    %v486 = vld [vmem:[#allocation7 + $0x3e8] sm:$0xff]
    %v487 = vld [vmem:[#allocation7 + $0x3f0] sm:$0xff]
    %v488 = vld [vmem:[#allocation7 + $0x3f8] sm:$0xff]
    %v489 = vld [vmem:[#allocation7 + $0x400] sm:$0xff]
    %v490 = vld [vmem:[#allocation7 + $0x408] sm:$0xff]
    %v491 = vld [vmem:[#allocation7 + $0x410] sm:$0xff]
    %v492 = vld [vmem:[#allocation7 + $0x418] sm:$0xff]
    %v493 = vld [vmem:[#allocation7 + $0x420] sm:$0xff]
    %v494 = vld [vmem:[#allocation7 + $0x428] sm:$0xff]
    %v495 = vld [vmem:[#allocation7 + $0x430] sm:$0xff]
    %v496 = vld [vmem:[#allocation7 + $0x438] sm:$0xff]
    %v497 = vld [vmem:[#allocation7 + $0x440] sm:$0xff]
    %v498 = vld [vmem:[#allocation7 + $0x448] sm:$0xff]
    %v499 = vld [vmem:[#allocation7 + $0x450] sm:$0xff]
    %v500 = vld [vmem:[#allocation7 + $0x458] sm:$0xff]
    %v501 = vld [vmem:[#allocation7 + $0x460] sm:$0xff]
    %v502 = vld [vmem:[#allocation7 + $0x468] sm:$0xff]
    %v503 = vld [vmem:[#allocation7 + $0x470] sm:$0xff]
    %v504 = vld [vmem:[#allocation7 + $0x478] sm:$0xff]
    %v505 = vld [vmem:[#allocation7 + $0x480] sm:$0xff]
    %v506 = vld [vmem:[#allocation7 + $0x488] sm:$0xff]
    %v507 = vld [vmem:[#allocation7 + $0x490] sm:$0xff]
    %v508 = vld [vmem:[#allocation7 + $0x498] sm:$0xff]
    %v509 = vld [vmem:[#allocation7 + $0x4a0] sm:$0xff]
    %v510 = vld [vmem:[#allocation7 + $0x4a8] sm:$0xff]
    %v511 = vld [vmem:[#allocation7 + $0x4b0] sm:$0xff]
    %v512 = vld [vmem:[#allocation7 + $0x4b8] sm:$0xff]
    %v513 = vld [vmem:[#allocation7 + $0x4c0] sm:$0xff]
    %v514 = vld [vmem:[#allocation7 + $0x4c8] sm:$0xff]
    %v515 = vld [vmem:[#allocation7 + $0x4d0] sm:$0xff]
    %v516 = vld [vmem:[#allocation7 + $0x4d8] sm:$0xff]
    %v517 = vld [vmem:[#allocation7 + $0x4e0] sm:$0xff]
    %v518 = vld [vmem:[#allocation7 + $0x4e8] sm:$0xff]
    %v519 = vld [vmem:[#allocation7 + $0x4f0] sm:$0xff]
    %v520 = vld [vmem:[#allocation7 + $0x4f8] sm:$0xff]
    %v521 = vld [vmem:[#allocation7 + $0x500] sm:$0xff]
    %v522 = vld [vmem:[#allocation7 + $0x508] sm:$0xff]
    %v523 = vld [vmem:[#allocation7 + $0x510] sm:$0xff]
    %v524 = vld [vmem:[#allocation7 + $0x518] sm:$0xff]
    %v525 = vld [vmem:[#allocation7 + $0x520] sm:$0xff]
    %v526 = vld [vmem:[#allocation7 + $0x528] sm:$0xff]
    %v527 = vld [vmem:[#allocation7 + $0x530] sm:$0xff]
    %v528 = vld [vmem:[#allocation7 + $0x538] sm:$0xff]
    %v529 = vld [vmem:[#allocation7 + $0x540] sm:$0xff]
    %v530 = vld [vmem:[#allocation7 + $0x548] sm:$0xff]
    %v531 = vld [vmem:[#allocation7 + $0x550] sm:$0xff]
    %v532 = vld [vmem:[#allocation7 + $0x558] sm:$0xff]
    %v533 = vld [vmem:[#allocation7 + $0x560] sm:$0xff]
    %v534 = vld [vmem:[#allocation7 + $0x568] sm:$0xff]
    %v535 = vld [vmem:[#allocation7 + $0x570] sm:$0xff]
    %v536 = vld [vmem:[#allocation7 + $0x578] sm:$0xff]
    %v537 = vld [vmem:[#allocation7 + $0x580] sm:$0xff]
    %v538 = vld [vmem:[#allocation7 + $0x588] sm:$0xff]
    %v539 = vld [vmem:[#allocation7 + $0x590] sm:$0xff]
    %v540 = vld [vmem:[#allocation7 + $0x598] sm:$0xff]
    %v541 = vld [vmem:[#allocation7 + $0x5a0] sm:$0xff]
    %v542 = vld [vmem:[#allocation7 + $0x5a8] sm:$0xff]
    %v543 = vld [vmem:[#allocation7 + $0x5b0] sm:$0xff]
    %v544 = vld [vmem:[#allocation7 + $0x5b8] sm:$0xff]
    %v545 = vld [vmem:[#allocation7 + $0x5c0] sm:$0xff]
    %v546 = vld [vmem:[#allocation7 + $0x5c8] sm:$0xff]
    %v547 = vld [vmem:[#allocation7 + $0x5d0] sm:$0xff]
    %v548 = vld [vmem:[#allocation7 + $0x5d8] sm:$0xff]
    %v549 = vld [vmem:[#allocation7 + $0x5e0] sm:$0xff]
    %v550 = vld [vmem:[#allocation7 + $0x5e8] sm:$0xff]
    %v551 = vld [vmem:[#allocation7 + $0x5f0] sm:$0xff]
    %v552 = vld [vmem:[#allocation7 + $0x5f8] sm:$0xff]
    %v553 = vld [vmem:[%s6] sm:$0x7]
    %v555 = vlaneseq
    %v556 = vshrl.u32 %v555, 7
    %v557 = vsub.s32 0, %v556
    %v558 = vrot.slane %v553, %v557
    %v559 = vlaneseq
    %v560 = vshrl.u32 %v559, 7
    %v561 = vsub.s32 1, %v560
    %v562 = vrot.slane %v553, %v561
    %v563 = vlaneseq
    %v564 = vshrl.u32 %v563, 7
    %v565 = vsub.s32 2, %v564
    %v566 = vrot.slane %v553, %v565
    %570 = vmatprep.subr.mxu0 %v362
    %571 = vmatpush1.msra.mxu0 %v361
    %572 = vmatprep.subr.mxu0 %v365
    %573 = vmatpush1.msra.mxu0 %v364
    %574 = vmatprep.subr.mxu0 %v368
    %575 = vmatpush1.msra.mxu0 %v367
    %576 = vmatprep.subr.mxu0 %v371
    %577 = vmatpush1.msra.mxu0 %v370
    %578 = vmatprep.subr.mxu0 %v374
    %579 = vmatpush1.msra.mxu0 %v373
    %580 = vmatprep.subr.mxu0 %v377
    %581 = vmatpush1.msra.mxu0 %v376
    %582 = vmatprep.subr.mxu0 %v380
    %583 = vmatpush1.msra.mxu0 %v379
    %584 = vmatprep.subr.mxu0 %v383
    %585 = vmatpush1.msra.mxu0 %v382
    %586 = vmatprep.subr.mxu0 %v386
    %587 = vmatpush1.msra.mxu0 %v385
    %588 = vmatprep.subr.mxu0 %v389
    %589 = vmatpush1.msra.mxu0 %v388
    %590 = vmatprep.subr.mxu0 %v392
    %591 = vmatpush1.msra.mxu0 %v391
    %592 = vmatprep.subr.mxu0 %v395
    %593 = vmatpush1.msra.mxu0 %v394
    %594 = vmatprep.subr.mxu0 %v398
    %595 = vmatpush1.msra.mxu0 %v397
    %596 = vmatprep.subr.mxu0 %v401
    %597 = vmatpush1.msra.mxu0 %v400
    %598 = vmatprep.subr.mxu0 %v404
    %599 = vmatpush1.msra.mxu0 %v403
    %600 = vmatprep.subr.mxu0 %v407
    %601 = vmatpush1.msra.mxu0 %v406
    %602 = vmatprep.subr.mxu0 %v410
    %603 = vmatpush1.msra.mxu0 %v409
    %604 = vmatprep.subr.mxu0 %v413
    %605 = vmatpush1.msra.mxu0 %v412
    %606 = vmatprep.subr.mxu0 %v416
    %607 = vmatpush1.msra.mxu0 %v415
    %608 = vmatprep.subr.mxu0 %v419
    %609 = vmatpush1.msra.mxu0 %v418
    %610 = vmatprep.subr.mxu0 %v422
    %611 = vmatpush1.msra.mxu0 %v421
    %612 = vmatprep.subr.mxu0 %v425
    %613 = vmatpush1.msra.mxu0 %v424
    %614 = vmatprep.subr.mxu0 %v428
    %615 = vmatpush1.msra.mxu0 %v427
    %616 = vmatprep.subr.mxu0 %v431
    %617 = vmatpush1.msra.mxu0 %v430
    %618 = vmatprep.subr.mxu0 %v434
    %619 = vmatpush1.msra.mxu0 %v433
    %620 = vmatprep.subr.mxu0 %v437
    %621 = vmatpush1.msra.mxu0 %v436
    %622 = vmatprep.subr.mxu0 %v440
    %623 = vmatpush1.msra.mxu0 %v439
    %624 = vmatprep.subr.mxu0 %v443
    %625 = vmatpush1.msra.mxu0 %v442
    %626 = vmatprep.subr.mxu0 %v446
    %627 = vmatpush1.msra.mxu0 %v445
    %628 = vmatprep.subr.mxu0 %v449
    %629 = vmatpush1.msra.mxu0 %v448
    %630 = vmatprep.subr.mxu0 %v452
    %631 = vmatpush1.msra.mxu0 %v451
    %632 = vmatprep.subr.mxu0 %v455
    %633 = vmatpush1.msra.mxu0 %v454
    %634 = vmatprep.mubr.f32.mxu0 %v358
    %635 = vmatmul.mubr.f32.gmra.mrb[0].mxu0 %v357
    %v636 = vpop.f32.mrb[0].mxu0
    %v637 = vadd.f32 %v558, %v636
    %v638 = vpop.f32.mrb[0].mxu0
    %v639 = vadd.f32 %v562, %v638
    %640 = vdwg.mxu0
    %641 = vmatprep.subr.mxu0 %v458
    %642 = vmatpush1.msra.mxu0 %v457
    %643 = vmatprep.subr.mxu0 %v461
    %644 = vmatpush1.msra.mxu0 %v460
    %645 = vmatprep.subr.mxu0 %v464
    %646 = vmatpush1.msra.mxu0 %v463
    %647 = vmatprep.subr.mxu0 %v467
    %648 = vmatpush1.msra.mxu0 %v466
    %649 = vmatprep.subr.mxu0 %v470
    %650 = vmatpush1.msra.mxu0 %v469
    %651 = vmatprep.subr.mxu0 %v473
    %652 = vmatpush1.msra.mxu0 %v472
    %653 = vmatprep.subr.mxu0 %v476
    %654 = vmatpush1.msra.mxu0 %v475
    %655 = vmatprep.subr.mxu0 %v479
    %656 = vmatpush1.msra.mxu0 %v478
    %657 = vmatprep.subr.mxu0 %v482
    %658 = vmatpush1.msra.mxu0 %v481
    %659 = vmatprep.subr.mxu0 %v485
    %660 = vmatpush1.msra.mxu0 %v484
    %661 = vmatprep.subr.mxu0 %v488
    %662 = vmatpush1.msra.mxu0 %v487
    %663 = vmatprep.subr.mxu0 %v491
    %664 = vmatpush1.msra.mxu0 %v490
    %665 = vmatprep.subr.mxu0 %v494
    %666 = vmatpush1.msra.mxu0 %v493
    %667 = vmatprep.subr.mxu0 %v497
    %668 = vmatpush1.msra.mxu0 %v496
    %669 = vmatprep.subr.mxu0 %v500
    %670 = vmatpush1.msra.mxu0 %v499
    %671 = vmatprep.subr.mxu0 %v503
    %672 = vmatpush1.msra.mxu0 %v502
    %673 = vmatprep.subr.mxu0 %v506
    %674 = vmatpush1.msra.mxu0 %v505
    %675 = vmatprep.subr.mxu0 %v509
    %676 = vmatpush1.msra.mxu0 %v508
    %677 = vmatprep.subr.mxu0 %v512
    %678 = vmatpush1.msra.mxu0 %v511
    %679 = vmatprep.subr.mxu0 %v515
    %680 = vmatpush1.msra.mxu0 %v514
    %681 = vmatprep.subr.mxu0 %v518
    %682 = vmatpush1.msra.mxu0 %v517
    %683 = vmatprep.subr.mxu0 %v521
    %684 = vmatpush1.msra.mxu0 %v520
    %685 = vmatprep.subr.mxu0 %v524
    %686 = vmatpush1.msra.mxu0 %v523
    %687 = vmatprep.subr.mxu0 %v527
    %688 = vmatpush1.msra.mxu0 %v526
    %689 = vmatprep.subr.mxu0 %v530
    %690 = vmatpush1.msra.mxu0 %v529
    %691 = vmatprep.subr.mxu0 %v533
    %692 = vmatpush1.msra.mxu0 %v532
    %693 = vmatprep.subr.mxu0 %v536
    %694 = vmatpush1.msra.mxu0 %v535
    %695 = vmatprep.subr.mxu0 %v539
    %696 = vmatpush1.msra.mxu0 %v538
    %697 = vmatprep.subr.mxu0 %v542
    %698 = vmatpush1.msra.mxu0 %v541
    %699 = vmatprep.subr.mxu0 %v545
    %700 = vmatpush1.msra.mxu0 %v544
    %701 = vmatprep.subr.mxu0 %v548
    %702 = vmatpush1.msra.mxu0 %v547
    %703 = vmatprep.subr.mxu0 %v551
    %704 = vmatpush1.msra.mxu0 %v550
    %705 = vmatprep.mubr.f32.mxu0 %v360
    %706 = vmatmul.mubr.f32.gmra.mrb[0].mxu0 %v359
    %v707 = vpop.f32.mrb[0].mxu0
    %v708 = vadd.f32 %v637, %v707
    %v709 = vpop.f32.mrb[0].mxu0
    %v710 = vadd.f32 %v639, %v709
    %711 = vdwg.mxu0
    %712 = vmatprep.subr.mxu0 0.0
    %713 = vmatpush1.msra.mxu0 %v363
    %714 = vmatprep.subr.mxu0 0.0
    %715 = vmatpush1.msra.mxu0 %v366
    %716 = vmatprep.subr.mxu0 0.0
    %717 = vmatpush1.msra.mxu0 %v369
    %718 = vmatprep.subr.mxu0 0.0
    %719 = vmatpush1.msra.mxu0 %v372
    %720 = vmatprep.subr.mxu0 0.0
    %721 = vmatpush1.msra.mxu0 %v375
    %722 = vmatprep.subr.mxu0 0.0
    %723 = vmatpush1.msra.mxu0 %v378
    %724 = vmatprep.subr.mxu0 0.0
    %725 = vmatpush1.msra.mxu0 %v381
    %726 = vmatprep.subr.mxu0 0.0
    %727 = vmatpush1.msra.mxu0 %v384
    %728 = vmatprep.subr.mxu0 0.0
    %729 = vmatpush1.msra.mxu0 %v387
    %730 = vmatprep.subr.mxu0 0.0
    %731 = vmatpush1.msra.mxu0 %v390
    %732 = vmatprep.subr.mxu0 0.0
    %733 = vmatpush1.msra.mxu0 %v393
    %734 = vmatprep.subr.mxu0 0.0
    %735 = vmatpush1.msra.mxu0 %v396
    %736 = vmatprep.subr.mxu0 0.0
    %737 = vmatpush1.msra.mxu0 %v399
    %738 = vmatprep.subr.mxu0 0.0
    %739 = vmatpush1.msra.mxu0 %v402
    %740 = vmatprep.subr.mxu0 0.0
    %741 = vmatpush1.msra.mxu0 %v405
    %742 = vmatprep.subr.mxu0 0.0
    %743 = vmatpush1.msra.mxu0 %v408
    %744 = vmatprep.subr.mxu0 0.0
    %745 = vmatpush1.msra.mxu0 %v411
    %746 = vmatprep.subr.mxu0 0.0
    %747 = vmatpush1.msra.mxu0 %v414
    %748 = vmatprep.subr.mxu0 0.0
    %749 = vmatpush1.msra.mxu0 %v417
    %750 = vmatprep.subr.mxu0 0.0
    %751 = vmatpush1.msra.mxu0 %v420
    %752 = vmatprep.subr.mxu0 0.0
    %753 = vmatpush1.msra.mxu0 %v423
    %754 = vmatprep.subr.mxu0 0.0
    %755 = vmatpush1.msra.mxu0 %v426
    %756 = vmatprep.subr.mxu0 0.0
    %757 = vmatpush1.msra.mxu0 %v429
    %758 = vmatprep.subr.mxu0 0.0
    %759 = vmatpush1.msra.mxu0 %v432
    %760 = vmatprep.subr.mxu0 0.0
    %761 = vmatpush1.msra.mxu0 %v435
    %762 = vmatprep.subr.mxu0 0.0
    %763 = vmatpush1.msra.mxu0 %v438
    %764 = vmatprep.subr.mxu0 0.0
    %765 = vmatpush1.msra.mxu0 %v441
    %766 = vmatprep.subr.mxu0 0.0
    %767 = vmatpush1.msra.mxu0 %v444
    %768 = vmatprep.subr.mxu0 0.0
    %769 = vmatpush1.msra.mxu0 %v447
    %770 = vmatprep.subr.mxu0 0.0
    %771 = vmatpush1.msra.mxu0 %v450
    %772 = vmatprep.subr.mxu0 0.0
    %773 = vmatpush1.msra.mxu0 %v453
    %774 = vmatprep.subr.mxu0 0.0
    %775 = vmatpush1.msra.mxu0 %v456
    %776 = vmatprep.mubr.f32.mxu0 %v358
    %777 = vmatmul.mubr.f32.gmra.mrb[0].mxu0 %v357
    %v778 = vpop.f32.mrb[0].mxu0
    %v779 = vadd.f32 %v566, %v778
    %v780 = vpop.f32.mrb[0].mxu0
    %781 = vdwg.mxu0
    %782 = vmatprep.subr.mxu0 0.0
    %783 = vmatpush1.msra.mxu0 %v459
    %784 = vmatprep.subr.mxu0 0.0
    %785 = vmatpush1.msra.mxu0 %v462
    %786 = vmatprep.subr.mxu0 0.0
    %787 = vmatpush1.msra.mxu0 %v465
    %788 = vmatprep.subr.mxu0 0.0
    %789 = vmatpush1.msra.mxu0 %v468
    %790 = vmatprep.subr.mxu0 0.0
    %791 = vmatpush1.msra.mxu0 %v471
    %792 = vmatprep.subr.mxu0 0.0
    %793 = vmatpush1.msra.mxu0 %v474
    %794 = vmatprep.subr.mxu0 0.0
    %795 = vmatpush1.msra.mxu0 %v477
    %796 = vmatprep.subr.mxu0 0.0
    %797 = vmatpush1.msra.mxu0 %v480
    %798 = vmatprep.subr.mxu0 0.0
    %799 = vmatpush1.msra.mxu0 %v483
    %800 = vmatprep.subr.mxu0 0.0
    %801 = vmatpush1.msra.mxu0 %v486
    %802 = vmatprep.subr.mxu0 0.0
    %803 = vmatpush1.msra.mxu0 %v489
    %804 = vmatprep.subr.mxu0 0.0
    %805 = vmatpush1.msra.mxu0 %v492
    %806 = vmatprep.subr.mxu0 0.0
    %807 = vmatpush1.msra.mxu0 %v495
    %808 = vmatprep.subr.mxu0 0.0
    %809 = vmatpush1.msra.mxu0 %v498
    %810 = vmatprep.subr.mxu0 0.0
    %811 = vmatpush1.msra.mxu0 %v501
    %812 = vmatprep.subr.mxu0 0.0
    %813 = vmatpush1.msra.mxu0 %v504
    %814 = vmatprep.subr.mxu0 0.0
    %815 = vmatpush1.msra.mxu0 %v507
    %816 = vmatprep.subr.mxu0 0.0
    %817 = vmatpush1.msra.mxu0 %v510
    %818 = vmatprep.subr.mxu0 0.0
    %819 = vmatpush1.msra.mxu0 %v513
    %820 = vmatprep.subr.mxu0 0.0
    %821 = vmatpush1.msra.mxu0 %v516
    %822 = vmatprep.subr.mxu0 0.0
    %823 = vmatpush1.msra.mxu0 %v519
    %824 = vmatprep.subr.mxu0 0.0
    %825 = vmatpush1.msra.mxu0 %v522
    %826 = vmatprep.subr.mxu0 0.0
    %827 = vmatpush1.msra.mxu0 %v525
    %828 = vmatprep.subr.mxu0 0.0
    %829 = vmatpush1.msra.mxu0 %v528
    %830 = vmatprep.subr.mxu0 0.0
    %831 = vmatpush1.msra.mxu0 %v531
    %832 = vmatprep.subr.mxu0 0.0
    %833 = vmatpush1.msra.mxu0 %v534
    %834 = vmatprep.subr.mxu0 0.0
    %835 = vmatpush1.msra.mxu0 %v537
    %836 = vmatprep.subr.mxu0 0.0
    %837 = vmatpush1.msra.mxu0 %v540
    %838 = vmatprep.subr.mxu0 0.0
    %839 = vmatpush1.msra.mxu0 %v543
    %840 = vmatprep.subr.mxu0 0.0
    %841 = vmatpush1.msra.mxu0 %v546
    %842 = vmatprep.subr.mxu0 0.0
    %843 = vmatpush1.msra.mxu0 %v549
    %844 = vmatprep.subr.mxu0 0.0
    %845 = vmatpush1.msra.mxu0 %v552
    %846 = vmatprep.mubr.f32.mxu0 %v360
    %847 = vmatmul.mubr.f32.gmra.mrb[0].mxu0 %v359
    %v848 = vpop.f32.mrb[0].mxu0
    %v849 = vadd.f32 %v779, %v848
    %v850 = vpop.f32.mrb[0].mxu0
    %851 = vdwg.mxu0
    %v852 = vld [vmem:[%s7] sm:$0x7]
    %v853 = vld [vmem:[%s8] sm:$0x7]
    %v854 = vadd.f32 %v708, %v710
    %v855 = vadd.f32 %v854, %v849
    %856 = vadd.xlane.f32.xlu0 %v855
    %v857 = vpop.xlane.xlu0 %856
    %v858 = vmul.f32 %v708, %v708
    %v859 = vmul.f32 %v710, %v710
    %v860 = vmul.f32 %v849, %v849
    %v861 = vadd.f32 %v858, %v859
    %v862 = vadd.f32 %v861, %v860
    %863 = vadd.xlane.f32.xlu0 %v862
    %v864 = vpop.xlane.xlu0 %863
    %v865 = vmul.f32 %v857, 0.0033333334
    %v866 = vmul.f32 %v864, 0.0033333334
    %v867 = vmul.f32 %v865, %v865
    %v868 = vsub.f32 %v866, %v867
    %v869 = vsub.f32 %v708, %v865
    %v870 = vsub.f32 %v710, %v865
    %v871 = vsub.f32 %v849, %v865
    %v872 = vadd.f32 %v868, 1e-05
    %v873 = vrsqrt.pop %v872
    %v874 = vmul.f32 %v869, %v873
    %v875 = vmul.f32 %v870, %v873
    %v876 = vmul.f32 %v871, %v873
    %v878 = vlaneseq
    %v879 = vshrl.u32 %v878, 7
    %v880 = vsub.s32 0, %v879
    %v881 = vrot.slane %v852, %v880
    %v882 = vlaneseq
    %v883 = vshrl.u32 %v882, 7
    %v884 = vsub.s32 1, %v883
    %v885 = vrot.slane %v852, %v884
    %v886 = vlaneseq
    %v887 = vshrl.u32 %v886, 7
    %v888 = vsub.s32 2, %v887
    %v889 = vrot.slane %v852, %v888
    %v893 = vmul.f32 %v874, %v881
    %v894 = vmul.f32 %v875, %v885
    %v895 = vmul.f32 %v876, %v889
    %v897 = vlaneseq
    %v898 = vshrl.u32 %v897, 7
    %v899 = vsub.s32 0, %v898
    %v900 = vrot.slane %v853, %v899
    %v901 = vlaneseq
    %v902 = vshrl.u32 %v901, 7
    %v903 = vsub.s32 1, %v902
    %v904 = vrot.slane %v853, %v903
    %v905 = vlaneseq
    %v906 = vshrl.u32 %v905, 7
    %v907 = vsub.s32 2, %v906
    %v908 = vrot.slane %v853, %v907
    %v912 = vadd.f32 %v893, %v900
    %v913 = vadd.f32 %v894, %v904
    %v914 = vadd.f32 %v895, %v908
    %v915 = vmax.f32 %v912, 0.0
    %v916 = vmax.f32 %v913, 0.0
    %v917 = vmax.f32 %v914, 0.0
    %v918 = vld [vmem:[#allocation8] sm:$0xff]
    %v919 = vld [vmem:[#allocation8 + $0x8] sm:$0xff]
    %v920 = vld [vmem:[#allocation8 + $0x10] sm:$0xff]
    %v921 = vld [vmem:[#allocation8 + $0x18] sm:$0xff]
    %v922 = vld [vmem:[#allocation8 + $0x20] sm:$0xff]
    %v923 = vld [vmem:[#allocation8 + $0x28] sm:$0xff]
    %v924 = vld [vmem:[#allocation8 + $0x30] sm:$0xff]
    %v925 = vld [vmem:[#allocation8 + $0x38] sm:$0xff]
    %v926 = vld [vmem:[#allocation8 + $0x40] sm:$0xff]
    %v927 = vld [vmem:[#allocation8 + $0x48] sm:$0xff]
    %v928 = vld [vmem:[#allocation8 + $0x50] sm:$0xff]
    %v929 = vld [vmem:[#allocation8 + $0x58] sm:$0xff]
    %v930 = vld [vmem:[#allocation8 + $0x60] sm:$0xff]
    %v931 = vld [vmem:[#allocation8 + $0x68] sm:$0xff]
    %v932 = vld [vmem:[#allocation8 + $0x70] sm:$0xff]
    %v933 = vld [vmem:[#allocation8 + $0x78] sm:$0xff]
    %v934 = vld [vmem:[#allocation8 + $0x80] sm:$0xff]
    %v935 = vld [vmem:[#allocation8 + $0x88] sm:$0xff]
    %v936 = vld [vmem:[#allocation8 + $0x90] sm:$0xff]
    %v937 = vld [vmem:[#allocation8 + $0x98] sm:$0xff]
    %v938 = vld [vmem:[#allocation8 + $0xa0] sm:$0xff]
    %v939 = vld [vmem:[#allocation8 + $0xa8] sm:$0xff]
    %v940 = vld [vmem:[#allocation8 + $0xb0] sm:$0xff]
    %v941 = vld [vmem:[#allocation8 + $0xb8] sm:$0xff]
    %v942 = vld [vmem:[#allocation8 + $0xc0] sm:$0xff]
    %v943 = vld [vmem:[#allocation8 + $0xc8] sm:$0xff]
    %v944 = vld [vmem:[#allocation8 + $0xd0] sm:$0xff]
    %v945 = vld [vmem:[#allocation8 + $0xd8] sm:$0xff]
    %v946 = vld [vmem:[#allocation8 + $0xe0] sm:$0xff]
    %v947 = vld [vmem:[#allocation8 + $0xe8] sm:$0xff]
    %v948 = vld [vmem:[#allocation8 + $0xf0] sm:$0xff]
    %v949 = vld [vmem:[#allocation8 + $0xf8] sm:$0xff]
    %v950 = vld [vmem:[#allocation8 + $0x100] sm:$0xff]
    %v951 = vld [vmem:[#allocation8 + $0x108] sm:$0xff]
    %v952 = vld [vmem:[#allocation8 + $0x110] sm:$0xff]
    %v953 = vld [vmem:[#allocation8 + $0x118] sm:$0xff]
    %v954 = vld [vmem:[#allocation8 + $0x120] sm:$0xff]
    %v955 = vld [vmem:[#allocation8 + $0x128] sm:$0xff]
    %v956 = vld [vmem:[#allocation8 + $0x130] sm:$0xff]
    %v957 = vld [vmem:[#allocation8 + $0x138] sm:$0xff]
    %v958 = vld [vmem:[#allocation8 + $0x140] sm:$0xff]
    %v959 = vld [vmem:[#allocation8 + $0x148] sm:$0xff]
    %v960 = vld [vmem:[#allocation8 + $0x150] sm:$0xff]
    %v961 = vld [vmem:[#allocation8 + $0x158] sm:$0xff]
    %v962 = vld [vmem:[#allocation8 + $0x160] sm:$0xff]
    %v963 = vld [vmem:[#allocation8 + $0x168] sm:$0xff]
    %v964 = vld [vmem:[#allocation8 + $0x170] sm:$0xff]
    %v965 = vld [vmem:[#allocation8 + $0x178] sm:$0xff]
    %v966 = vld [vmem:[%s10] sm:$0x1]
    %v968 = vlaneseq
    %v969 = vshrl.u32 %v968, 7
    %v970 = vsub.s32 0, %v969
    %v971 = vrot.slane %v966, %v970
    %973 = vmatprep.subr.mxu0 0.0
    %974 = vmatpush1.msra.mxu0 %v918
    %975 = vmatprep.subr.mxu0 0.0
    %976 = vmatpush1.msra.mxu0 %v919
    %977 = vmatprep.subr.mxu0 0.0
    %978 = vmatpush1.msra.mxu0 %v920
    %979 = vmatprep.subr.mxu0 0.0
    %980 = vmatpush1.msra.mxu0 %v921
    %981 = vmatprep.subr.mxu0 0.0
    %982 = vmatpush1.msra.mxu0 %v922
    %983 = vmatprep.subr.mxu0 0.0
    %984 = vmatpush1.msra.mxu0 %v923
    %985 = vmatprep.subr.mxu0 0.0
    %986 = vmatpush1.msra.mxu0 %v924
    %987 = vmatprep.subr.mxu0 0.0
    %988 = vmatpush1.msra.mxu0 %v925
    %989 = vmatprep.subr.mxu0 0.0
    %990 = vmatpush1.msra.mxu0 %v926
    %991 = vmatprep.subr.mxu0 0.0
    %992 = vmatpush1.msra.mxu0 %v927
    %993 = vmatprep.subr.mxu0 0.0
    %994 = vmatpush1.msra.mxu0 %v928
    %995 = vmatprep.subr.mxu0 0.0
    %996 = vmatpush1.msra.mxu0 %v929
    %997 = vmatprep.subr.mxu0 0.0
    %998 = vmatpush1.msra.mxu0 %v930
    %999 = vmatprep.subr.mxu0 0.0
    %1000 = vmatpush1.msra.mxu0 %v931
    %1001 = vmatprep.subr.mxu0 0.0
    %1002 = vmatpush1.msra.mxu0 %v932
    %1003 = vmatprep.subr.mxu0 0.0
    %1004 = vmatpush1.msra.mxu0 %v933
    %1005 = vmatprep.subr.mxu0 0.0
    %1006 = vmatpush1.msra.mxu0 %v934
    %1007 = vmatprep.subr.mxu0 0.0
    %1008 = vmatpush1.msra.mxu0 %v935
    %1009 = vmatprep.subr.mxu0 0.0
    %1010 = vmatpush1.msra.mxu0 %v936
    %1011 = vmatprep.subr.mxu0 0.0
    %1012 = vmatpush1.msra.mxu0 %v937
    %1013 = vmatprep.subr.mxu0 0.0
    %1014 = vmatpush1.msra.mxu0 %v938
    %1015 = vmatprep.subr.mxu0 0.0
    %1016 = vmatpush1.msra.mxu0 %v939
    %1017 = vmatprep.subr.mxu0 0.0
    %1018 = vmatpush1.msra.mxu0 %v940
    %1019 = vmatprep.subr.mxu0 0.0
    %1020 = vmatpush1.msra.mxu0 %v941
    %1021 = vmatprep.subr.mxu0 0.0
    %1022 = vmatpush1.msra.mxu0 %v942
    %1023 = vmatprep.subr.mxu0 0.0
    %1024 = vmatpush1.msra.mxu0 %v943
    %1025 = vmatprep.subr.mxu0 0.0
    %1026 = vmatpush1.msra.mxu0 %v944
    %1027 = vmatprep.subr.mxu0 0.0
    %1028 = vmatpush1.msra.mxu0 %v945
    %1029 = vmatprep.subr.mxu0 0.0
    %1030 = vmatpush1.msra.mxu0 %v946
    %1031 = vmatprep.subr.mxu0 0.0
    %1032 = vmatpush1.msra.mxu0 %v947
    %1033 = vmatprep.subr.mxu0 0.0
    %1034 = vmatpush1.msra.mxu0 %v948
    %1035 = vmatprep.subr.mxu0 0.0
    %1036 = vmatpush1.msra.mxu0 %v949
    %1037 = vmatprep.mubr.f32.mxu0 %v916
    %1038 = vmatmul.mubr.f32.gmra.mrb[0].mxu0 %v915
    %v1039 = vpop.f32.mrb[0].mxu0
    %v1040 = vadd.f32 %v971, %v1039
    %v1041 = vpop.f32.mrb[0].mxu0
    %1042 = vdwg.mxu0
    %1043 = vmatprep.subr.mxu0 0.0
    %1044 = vmatpush1.msra.mxu0 %v950
    %1045 = vmatprep.subr.mxu0 0.0
    %1046 = vmatpush1.msra.mxu0 %v951
    %1047 = vmatprep.subr.mxu0 0.0
    %1048 = vmatpush1.msra.mxu0 %v952
    %1049 = vmatprep.subr.mxu0 0.0
    %1050 = vmatpush1.msra.mxu0 %v953
    %1051 = vmatprep.subr.mxu0 0.0
    %1052 = vmatpush1.msra.mxu0 %v954
    %1053 = vmatprep.subr.mxu0 0.0
    %1054 = vmatpush1.msra.mxu0 %v955
    %1055 = vmatprep.subr.mxu0 0.0
    %1056 = vmatpush1.msra.mxu0 %v956
    %1057 = vmatprep.subr.mxu0 0.0
    %1058 = vmatpush1.msra.mxu0 %v957
    %1059 = vmatprep.subr.mxu0 0.0
    %1060 = vmatpush1.msra.mxu0 %v958
    %1061 = vmatprep.subr.mxu0 0.0
    %1062 = vmatpush1.msra.mxu0 %v959
    %1063 = vmatprep.subr.mxu0 0.0
    %1064 = vmatpush1.msra.mxu0 %v960
    %1065 = vmatprep.subr.mxu0 0.0
    %1066 = vmatpush1.msra.mxu0 %v961
    %1067 = vmatprep.subr.mxu0 0.0
    %1068 = vmatpush1.msra.mxu0 %v962
    %1069 = vmatprep.subr.mxu0 0.0
    %1070 = vmatpush1.msra.mxu0 %v963
    %1071 = vmatprep.subr.mxu0 0.0
    %1072 = vmatpush1.msra.mxu0 %v964
    %1073 = vmatprep.subr.mxu0 0.0
    %1074 = vmatpush1.msra.mxu0 %v965
    %1075 = vmatprep.subr.mxu0 0.0
    %1076 = vmatpush1.msra.mxu0 0.0
    %1077 = vmatprep.subr.mxu0 0.0
    %1078 = vmatpush1.msra.mxu0 0.0
    %1079 = vmatprep.subr.mxu0 0.0
    %1080 = vmatpush1.msra.mxu0 0.0
    %1081 = vmatprep.subr.mxu0 0.0
    %1082 = vmatpush1.msra.mxu0 0.0
    %1083 = vmatprep.subr.mxu0 0.0
    %1084 = vmatpush1.msra.mxu0 0.0
    %1085 = vmatprep.subr.mxu0 0.0
    %1086 = vmatpush1.msra.mxu0 0.0
    %1087 = vmatprep.subr.mxu0 0.0
    %1088 = vmatpush1.msra.mxu0 0.0
    %1089 = vmatprep.subr.mxu0 0.0
    %1090 = vmatpush1.msra.mxu0 0.0
    %1091 = vmatprep.subr.mxu0 0.0
    %1092 = vmatpush1.msra.mxu0 0.0
    %1093 = vmatprep.subr.mxu0 0.0
    %1094 = vmatpush1.msra.mxu0 0.0
    %1095 = vmatprep.subr.mxu0 0.0
    %1096 = vmatpush1.msra.mxu0 0.0
    %1097 = vmatprep.subr.mxu0 0.0
    %1098 = vmatpush1.msra.mxu0 0.0
    %1099 = vmatprep.subr.mxu0 0.0
    %1100 = vmatpush1.msra.mxu0 0.0
    %1101 = vmatprep.subr.mxu0 0.0
    %1102 = vmatpush1.msra.mxu0 0.0
    %1103 = vmatprep.subr.mxu0 0.0
    %1104 = vmatpush1.msra.mxu0 0.0
    %1105 = vmatprep.subr.mxu0 0.0
    %1106 = vmatpush1.msra.mxu0 0.0
    %1107 = vmatprep.mubr.f32.mxu0 0.0
    %1108 = vmatmul.mubr.f32.gmra.mrb[0].mxu0 %v917
    %v1109 = vpop.f32.mrb[0].mxu0
    %v1110 = vadd.f32 %v1040, %v1109
    %v1111 = vpop.f32.mrb[0].mxu0
    %1112 = vdwg.mxu0
    %v1113 = vtanh.pop %v1110
    %1114 = vst [vmem:[#allocation10] sm:$0xff] %v1113
    // Predicated region
    $region62: #{tpu_custom_call.1} parent=1 // pred_check
      _
    $region63: #{tpu_custom_call.1} parent=1 // pred_check_branch
      %1116 = sbr.rel (0) target = $region65
    $region64: #{tpu_custom_call.1} parent=1 // pred_region
      %s1118 = ssub.s32 128, 128
      %1119 = vsyncadd [#allocation4], %s1118
      %s1121 = sshll.u32 [#allocation10], 4
      %s1122 = int_to_ptr.vmem [resolvable:$true] %s1121
      %1124 = dma.vmem_to_hbm [thread:$0]  %s1122, 128, %s11, [#allocation4]
    $region65: #{tpu_custom_call.1} parent=1 // pred_fallthru
      _
    // Predicated region
    $region66: #{tpu_custom_call.1} parent=1 // pred_check
      _
    $region67: #{tpu_custom_call.1} parent=1 // pred_check_branch
      %1126 = sbr.rel (0) target = $region69
    $region68: #{tpu_custom_call.1} parent=1 // pred_region
      %1127 = dma.done [#allocation4], 128
    $region69: #{tpu_custom_call.1} parent=1 // pred_fallthru
      _
    %1128 = vsyncpa [#allocation3], 1
    %1129 = vsyncpa [#allocation6], 1
    %1130 = vsyncpa [#allocation9], 1
    %1131 = vsyncpa [#allocation4], 1

</llo_original>
